<compile_context>
chip_gen: v7x
topology: tpu7x:2x2x1
jax: 0.10.0
libtpu: 0.0.40
codegen_flags: <defaults>
</compile_context>

<pallas_src>
import jax
import jax.numpy as jnp
from jax.experimental import pallas as pl
from jax.experimental.pallas import tpu as pltpu


def _round_up(n, m):
    return ((n + m - 1) // m) * m


def mlp_kernel(x_ref,
               w1_ref, b1_ref,
               w2_ref, b2_ref,
               w3_ref, b3_ref,
               w4_ref, b4_ref,
               o_ref):
    # x tile: (TB, D) bf16
    x = x_ref[...]

    # Layer 1: Linear(input_size, 64) + ReLU  (bf16 MXU, f32 accumulate)
    h1 = jnp.dot(x, w1_ref[...], preferred_element_type=jnp.float32) + b1_ref[...]
    h1 = jnp.maximum(h1, 0.0)

    # Layer 2: Linear(64, 32) + ReLU
    h2 = jnp.dot(h1.astype(jnp.bfloat16), w2_ref[...],
                 preferred_element_type=jnp.float32) + b2_ref[...]
    h2 = jnp.maximum(h2, 0.0)

    # Layer 3: Linear(32, 16) + ReLU
    h3 = jnp.dot(h2.astype(jnp.bfloat16), w3_ref[...],
                 preferred_element_type=jnp.float32) + b3_ref[...]
    h3 = jnp.maximum(h3, 0.0)

    # Layer 4: Linear(16, 1) on VPU (mul) + XLU (lane reduce) — avoids a
    # 1-output-lane MXU matmul.
    out = jnp.sum(h3 * w4_ref[...], axis=-1, keepdims=True) + b4_ref[...]

    o_ref[...] = out.astype(o_ref.dtype)


def mlp_forward(x, params, *, tb=2048):
    """x: [B, input_size] float32. params: dict of transposed f32 weights/biases."""
    B, D = x.shape

    # Batch tile: multiple of 128 (lane/sublane friendly, bf16 packs (16,128)),
    # capped so small batches don't over-pad and large batches get big
    # pipelined tiles (per-grid-step overhead ~0.35 us amortised over 2048 rows).
    tb = max(128, min(tb, _round_up(B, 128)))
    b_pad = _round_up(B, tb)

    # bf16 x stream (halves HBM read traffic); pad ragged tail with zeros.
    xb = x.astype(jnp.bfloat16)
    if b_pad != B:
        xb = jnp.pad(xb, ((0, b_pad - B), (0, 0)))

    # MXU weights in bf16; bias-add / final VPU layer stay f32.
    w1 = params["w1"].astype(jnp.bfloat16)
    w2 = params["w2"].astype(jnp.bfloat16)
    w3 = params["w3"].astype(jnp.bfloat16)
    w4t = params["w4"].reshape(1, 16).astype(jnp.float32)   # (16,1) -> (1,16)
    b1, b2, b3, b4 = params["b1"], params["b2"], params["b3"], params["b4"]

    grid = (pl.cdiv(b_pad, tb),)

    def resident(a):  # constant index_map -> stays in VMEM across grid steps
        return pl.BlockSpec(a.shape, lambda i: (0,) * a.ndim)

    # Roofline hint for XLA's scheduler around the custom call.
    flops = 2 * b_pad * (D * 64 + 64 * 32 + 32 * 16 + 16 * 1)
    bytes_accessed = (b_pad * D * 2          # x (bf16)
                      + b_pad * 4            # out (f32)
                      + (D * 64 + 64 * 32 + 32 * 16) * 2   # bf16 weights
                      + (16 + 64 + 32 + 16 + 1) * 4)       # f32 w4 + biases
    cost = pl.CostEstimate(flops=flops, transcendentals=0,
                           bytes_accessed=bytes_accessed)

    out = pl.pallas_call(
        mlp_kernel,
        out_shape=jax.ShapeDtypeStruct((b_pad, 1), jnp.float32),
        grid=grid,
        in_specs=[pl.BlockSpec((tb, D), lambda i: (i, 0)),
                  resident(w1), resident(b1),
                  resident(w2), resident(b2),
                  resident(w3), resident(b3),
                  resident(w4t), resident(b4)],
        out_specs=pl.BlockSpec((tb, 1), lambda i: (i, 0)),
        compiler_params=pltpu.CompilerParams(
            dimension_semantics=("parallel",)),
        cost_estimate=cost,
    )(xb, w1, b1, w2, b2, w3, b3, w4t, b4)

    return out[:B]


def init_params(key, input_size):
    """Deterministic init matching PyTorch Linear's U(-1/sqrt(fan_in), 1/sqrt(fan_in)).
    Weights are stored transposed: [in_features, out_features]."""
    dims = [(input_size, 64), (64, 32), (32, 16), (16, 1)]
    params = {}
    keys = jax.random.split(key, 2 * len(dims))
    for i, (fan_in, fan_out) in enumerate(dims):
        bound = 1.0 / jnp.sqrt(jnp.float32(fan_in))
        w = jax.random.uniform(keys[2 * i], (fan_in, fan_out),
                               minval=-bound, maxval=bound, dtype=jnp.float32)
        b = jax.random.uniform(keys[2 * i + 1], (1, fan_out),
                               minval=-bound, maxval=bound, dtype=jnp.float32)
        params[f"w{i + 1}"] = w
        params[f"b{i + 1}"] = b
    return params


def reference_forward_f32(x, params):
    """Pure-f32 reference (matches the PyTorch module's forward logic)."""
    h = x
    for i in range(1, 5):
        h = h @ params[f"w{i}"] + params[f"b{i}"]
        if i < 4:
            h = jnp.maximum(h, 0.0)
    return h


def reference_forward_bf16(x, params):
    """Pure-JAX reference emulating the kernel's bf16-operand / f32-accumulate math."""
    h = x.astype(jnp.bfloat16)
    for i in range(1, 4):
        w = params[f"w{i}"].astype(jnp.bfloat16)
        h = jnp.dot(h, w, preferred_element_type=jnp.float32) + params[f"b{i}"]
        h = jnp.maximum(h, 0.0).astype(jnp.bfloat16)
    h = h.astype(jnp.float32)
    return jnp.sum(h * params["w4"].reshape(1, 16), axis=-1, keepdims=True) + params["b4"]


if __name__ == "__main__":
    input_size = 32
    batch = 8

    key = jax.random.PRNGKey(0)
    k_x, k_p = jax.random.split(key)
    x = jax.random.normal(k_x, (batch, input_size), dtype=jnp.float32)
    params = init_params(k_p, input_size)

    out = mlp_forward(x, params)
    out = jax.block_until_ready(out)

    assert out.shape == (batch, 1)

    # Tight check against a pure-JAX emulation of the kernel's bf16/f32 math.
    ref_bf16 = reference_forward_bf16(x, params)
    assert jnp.allclose(out, ref_bf16, atol=2e-3, rtol=2e-3)

    # Loose check against the full-f32 PyTorch-equivalent reference
    # (bf16 MXU operands cost ~1e-2 relative).
    ref_f32 = reference_forward_f32(x, params)
    assert jnp.allclose(out, ref_f32, atol=1e-1, rtol=1e-1)

    print("KERNEL_OK")
</pallas_src>

<mosaic_0001>
module attributes {stable_mosaic.version = 11 : i64} {
  func.func @mlp_kernel(%arg0: i32, %arg1: memref<128x32xbf16, #tpu.memory_space<vmem>>, %arg2: memref<32x64xbf16, #tpu.memory_space<vmem>>, %arg3: memref<1x64xf32, #tpu.memory_space<vmem>>, %arg4: memref<64x32xbf16, #tpu.memory_space<vmem>>, %arg5: memref<1x32xf32, #tpu.memory_space<vmem>>, %arg6: memref<32x16xbf16, #tpu.memory_space<vmem>>, %arg7: memref<1x16xf32, #tpu.memory_space<vmem>>, %arg8: memref<1x16xf32, #tpu.memory_space<vmem>>, %arg9: memref<1x1xf32, #tpu.memory_space<vmem>>, %arg10: memref<128x1xf32, #tpu.memory_space<vmem>>) attributes {dimension_semantics = [#tpu.dimension_semantics<parallel>], iteration_bounds = array<i64: 1>, scalar_prefetch = 0 : i64, scratch_operands = 0 : i64, tpu.core_type = #tpu.core_type<tc>, window_params = [{transform_indices = @transform_0, window_bounds = array<i64: 128, 32>}, {pipeline_mode = #tpu.pipeline_mode<synchronous>, transform_indices = @transform_1, window_bounds = array<i64: 32, 64>}, {pipeline_mode = #tpu.pipeline_mode<synchronous>, transform_indices = @transform_2, window_bounds = array<i64: 1, 64>}, {pipeline_mode = #tpu.pipeline_mode<synchronous>, transform_indices = @transform_3, window_bounds = array<i64: 64, 32>}, {pipeline_mode = #tpu.pipeline_mode<synchronous>, transform_indices = @transform_4, window_bounds = array<i64: 1, 32>}, {pipeline_mode = #tpu.pipeline_mode<synchronous>, transform_indices = @transform_5, window_bounds = array<i64: 32, 16>}, {pipeline_mode = #tpu.pipeline_mode<synchronous>, transform_indices = @transform_6, window_bounds = array<i64: 1, 16>}, {pipeline_mode = #tpu.pipeline_mode<synchronous>, transform_indices = @transform_7, window_bounds = array<i64: 1, 16>}, {pipeline_mode = #tpu.pipeline_mode<synchronous>, transform_indices = @transform_8, window_bounds = array<i64: 1, 1>}, {transform_indices = @transform_9, window_bounds = array<i64: 128, 1>}]} {
    %c0 = arith.constant 0 : index
    %c0_0 = arith.constant 0 : index
    %0 = vector.load %arg1[%c0, %c0_0] : memref<128x32xbf16, #tpu.memory_space<vmem>>, vector<128x32xbf16>
    %c0_1 = arith.constant 0 : index
    %c0_2 = arith.constant 0 : index
    %1 = vector.load %arg2[%c0_1, %c0_2] : memref<32x64xbf16, #tpu.memory_space<vmem>>, vector<32x64xbf16>
    %cst = arith.constant dense<0.000000e+00> : vector<128x64xf32>
    %2 = tpu.matmul %0, %1, %cst {dimension_numbers = #tpu.dot_dimension_numbers<[1], [0], [0], [1], [0, 0, 1, 1], [], []>} : vector<128x32xbf16>, vector<32x64xbf16>, vector<128x64xf32> -> vector<128x64xf32>
    %c0_3 = arith.constant 0 : index
    %c0_4 = arith.constant 0 : index
    %3 = vector.load %arg3[%c0_3, %c0_4] : memref<1x64xf32, #tpu.memory_space<vmem>>, vector<1x64xf32>
    %4 = vector.broadcast %3 : vector<1x64xf32> to vector<128x64xf32>
    %5 = arith.addf %2, %4 : vector<128x64xf32>
    %cst_5 = arith.constant 0.000000e+00 : f32
    %6 = vector.broadcast %cst_5 : f32 to vector<128x64xf32>
    %7 = arith.maximumf %5, %6 : vector<128x64xf32>
    %8 = arith.truncf %7 : vector<128x64xf32> to vector<128x64xbf16>
    %c0_6 = arith.constant 0 : index
    %c0_7 = arith.constant 0 : index
    %9 = vector.load %arg4[%c0_6, %c0_7] : memref<64x32xbf16, #tpu.memory_space<vmem>>, vector<64x32xbf16>
    %cst_8 = arith.constant dense<0.000000e+00> : vector<128x32xf32>
    %10 = tpu.matmul %8, %9, %cst_8 {dimension_numbers = #tpu.dot_dimension_numbers<[1], [0], [0], [1], [0, 0, 1, 1], [], []>} : vector<128x64xbf16>, vector<64x32xbf16>, vector<128x32xf32> -> vector<128x32xf32>
    %c0_9 = arith.constant 0 : index
    %c0_10 = arith.constant 0 : index
    %11 = vector.load %arg5[%c0_9, %c0_10] : memref<1x32xf32, #tpu.memory_space<vmem>>, vector<1x32xf32>
    %12 = vector.broadcast %11 : vector<1x32xf32> to vector<128x32xf32>
    %13 = arith.addf %10, %12 : vector<128x32xf32>
    %cst_11 = arith.constant 0.000000e+00 : f32
    %14 = vector.broadcast %cst_11 : f32 to vector<128x32xf32>
    %15 = arith.maximumf %13, %14 : vector<128x32xf32>
    %16 = arith.truncf %15 : vector<128x32xf32> to vector<128x32xbf16>
    %c0_12 = arith.constant 0 : index
    %c0_13 = arith.constant 0 : index
    %17 = vector.load %arg6[%c0_12, %c0_13] : memref<32x16xbf16, #tpu.memory_space<vmem>>, vector<32x16xbf16>
    %cst_14 = arith.constant dense<0.000000e+00> : vector<128x16xf32>
    %18 = tpu.matmul %16, %17, %cst_14 {dimension_numbers = #tpu.dot_dimension_numbers<[1], [0], [0], [1], [0, 0, 1, 1], [], []>} : vector<128x32xbf16>, vector<32x16xbf16>, vector<128x16xf32> -> vector<128x16xf32>
    %c0_15 = arith.constant 0 : index
    %c0_16 = arith.constant 0 : index
    %19 = vector.load %arg7[%c0_15, %c0_16] : memref<1x16xf32, #tpu.memory_space<vmem>>, vector<1x16xf32>
    %20 = vector.broadcast %19 : vector<1x16xf32> to vector<128x16xf32>
    %21 = arith.addf %18, %20 : vector<128x16xf32>
    %cst_17 = arith.constant 0.000000e+00 : f32
    %22 = vector.broadcast %cst_17 : f32 to vector<128x16xf32>
    %23 = arith.maximumf %21, %22 : vector<128x16xf32>
    %c0_18 = arith.constant 0 : index
    %c0_19 = arith.constant 0 : index
    %24 = vector.load %arg8[%c0_18, %c0_19] : memref<1x16xf32, #tpu.memory_space<vmem>>, vector<1x16xf32>
    %25 = vector.broadcast %24 : vector<1x16xf32> to vector<128x16xf32>
    %26 = arith.mulf %23, %25 : vector<128x16xf32>
    %cst_20 = arith.constant dense<0.000000e+00> : vector<128xf32>
    %27 = vector.multi_reduction <add>, %26, %cst_20 [1] : vector<128x16xf32> to vector<128xf32>
    %28 = vector.shape_cast %27 : vector<128xf32> to vector<128x1xf32>
    %c0_21 = arith.constant 0 : index
    %c0_22 = arith.constant 0 : index
    %29 = vector.load %arg9[%c0_21, %c0_22] : memref<1x1xf32, #tpu.memory_space<vmem>>, vector<1x1xf32>
    %30 = vector.broadcast %29 : vector<1x1xf32> to vector<128x1xf32>
    %31 = arith.addf %28, %30 : vector<128x1xf32>
    %c0_23 = arith.constant 0 : index
    %c0_24 = arith.constant 0 : index
    %32 = vector.load %arg10[%c0_23, %c0_24] : memref<128x1xf32, #tpu.memory_space<vmem>>, vector<128x1xf32>
    tpu.vector_store %arg10[%c0_23, %c0_24], %31 {strides = array<i32>} : memref<128x1xf32, #tpu.memory_space<vmem>>, vector<128x1xf32>,
    return
  }
  func.func @transform_0(%arg0: i32) -> (i32, i32) {
    %c0_i32 = arith.constant 0 : i32
    %c0_i32_0 = arith.constant 0 : i32
    return %arg0, %c0_i32 : i32, i32
  }
  func.func @transform_1(%arg0: i32) -> (i32, i32) {
    %c0_i32 = arith.constant 0 : i32
    %c0_i32_0 = arith.constant 0 : i32
    %c0_i32_1 = arith.constant 0 : i32
    return %c0_i32, %c0_i32_0 : i32, i32
  }
  func.func @transform_2(%arg0: i32) -> (i32, i32) {
    %c0_i32 = arith.constant 0 : i32
    %c0_i32_0 = arith.constant 0 : i32
    %c0_i32_1 = arith.constant 0 : i32
    return %c0_i32, %c0_i32_0 : i32, i32
  }
  func.func @transform_3(%arg0: i32) -> (i32, i32) {
    %c0_i32 = arith.constant 0 : i32
    %c0_i32_0 = arith.constant 0 : i32
    %c0_i32_1 = arith.constant 0 : i32
    return %c0_i32, %c0_i32_0 : i32, i32
  }
  func.func @transform_4(%arg0: i32) -> (i32, i32) {
    %c0_i32 = arith.constant 0 : i32
    %c0_i32_0 = arith.constant 0 : i32
    %c0_i32_1 = arith.constant 0 : i32
    return %c0_i32, %c0_i32_0 : i32, i32
  }
  func.func @transform_5(%arg0: i32) -> (i32, i32) {
    %c0_i32 = arith.constant 0 : i32
    %c0_i32_0 = arith.constant 0 : i32
    %c0_i32_1 = arith.constant 0 : i32
    return %c0_i32, %c0_i32_0 : i32, i32
  }
  func.func @transform_6(%arg0: i32) -> (i32, i32) {
    %c0_i32 = arith.constant 0 : i32
    %c0_i32_0 = arith.constant 0 : i32
    %c0_i32_1 = arith.constant 0 : i32
    return %c0_i32, %c0_i32_0 : i32, i32
  }
  func.func @transform_7(%arg0: i32) -> (i32, i32) {
    %c0_i32 = arith.constant 0 : i32
    %c0_i32_0 = arith.constant 0 : i32
    %c0_i32_1 = arith.constant 0 : i32
    return %c0_i32, %c0_i32_0 : i32, i32
  }
  func.func @transform_8(%arg0: i32) -> (i32, i32) {
    %c0_i32 = arith.constant 0 : i32
    %c0_i32_0 = arith.constant 0 : i32
    %c0_i32_1 = arith.constant 0 : i32
    return %c0_i32, %c0_i32_0 : i32, i32
  }
  func.func @transform_9(%arg0: i32) -> (i32, i32) {
    %c0_i32 = arith.constant 0 : i32
    %c0_i32_0 = arith.constant 0 : i32
    return %arg0, %c0_i32 : i32, i32
  }
}

</mosaic_0001>

<llo_original>
// kernel: tpu_custom_call.1
$region0: #{tpu_custom_call.1}
  #allocation0 [shape = 'u32[]', space=smem, size = 0x4, offset = 0x4, fixed_abs, tag = 'smem constant byte address 0x4 - core index']
  #allocation1 [shape = 'u32[144,128]{1,0:T(1,128)}', space=vmem, size = 0x12000, scoped, tag = 'internal scratch']
  #allocation2 [shape = 'f32[1,1]{1,0:T(1,128)S(1)}', space=vmem, size = 0x200, scoped, tag = 'scoped memory for tpu_custom_call.1']
  %s0 = inlined_call_operand.vmem [shape: bf16[128,32], index: 0, kind: input, shape index: {}]
  %s1 = inlined_call_operand.vmem [shape: bf16[32,64], index: 1, kind: input, shape index: {}]
  %s2 = inlined_call_operand.vmem [shape: f32[1,64], index: 2, kind: input, shape index: {}]
  %s3 = inlined_call_operand.vmem [shape: bf16[64,32], index: 3, kind: input, shape index: {}]
  %s4 = inlined_call_operand.vmem [shape: f32[1,32], index: 4, kind: input, shape index: {}]
  %s5 = inlined_call_operand.vmem [shape: bf16[32,16], index: 5, kind: input, shape index: {}]
  %s6 = inlined_call_operand.vmem [shape: f32[1,16], index: 6, kind: input, shape index: {}]
  %s7 = inlined_call_operand.vmem [shape: f32[1,16], index: 7, kind: input, shape index: {}]
  %s8 = inlined_call_operand.<no memory space> [shape: f32[1,1], index: 8, kind: input, shape index: {}]
  %s9 = inlined_call_operand.vmem [shape: f32[128,1], index: 9, kind: output, shape index: {}]
  %s10 = sld [smem:[#allocation0]]
  $region46: #{tpu_custom_call.1} parent=0
    _
  %s12 = ssub.s32 1, %s10
  %s13 = scalar_select 0, %s12, %s10
  %v14 = vstv %s8
  %15 = vst [vmem:[#allocation2] sm:$0x1] %v14
  // Predicated region
  $region2: #{tpu_custom_call.1} parent=0 // pred_check
    _
  $region3: #{tpu_custom_call.1} parent=0 // pred_check_branch
    %17 = sbr.rel (0) target = $region5
  $region4: #{tpu_custom_call.1} parent=0 // pred_region
    _
  $region5: #{tpu_custom_call.1} parent=0 // pred_fallthru
    _
  // Predicated region
  $region6: #{tpu_custom_call.1} parent=0 // pred_check
    _
  $region7: #{tpu_custom_call.1} parent=0 // pred_check_branch
    %19 = sbr.rel (0) target = $region9
  $region8: #{tpu_custom_call.1} parent=0 // pred_region
    _
  $region9: #{tpu_custom_call.1} parent=0 // pred_fallthru
    _
  // Predicated region
  $region10: #{tpu_custom_call.1} parent=0 // pred_check
    _
  $region11: #{tpu_custom_call.1} parent=0 // pred_check_branch
    %21 = sbr.rel (0) target = $region13
  $region12: #{tpu_custom_call.1} parent=0 // pred_region
    _
  $region13: #{tpu_custom_call.1} parent=0 // pred_fallthru
    _
  // Predicated region
  $region14: #{tpu_custom_call.1} parent=0 // pred_check
    _
  $region15: #{tpu_custom_call.1} parent=0 // pred_check_branch
    %23 = sbr.rel (0) target = $region17
  $region16: #{tpu_custom_call.1} parent=0 // pred_region
    _
  $region17: #{tpu_custom_call.1} parent=0 // pred_fallthru
    _
  // Predicated region
  $region18: #{tpu_custom_call.1} parent=0 // pred_check
    _
  $region19: #{tpu_custom_call.1} parent=0 // pred_check_branch
    %25 = sbr.rel (0) target = $region21
  $region20: #{tpu_custom_call.1} parent=0 // pred_region
    _
  $region21: #{tpu_custom_call.1} parent=0 // pred_fallthru
    _
  // Predicated region
  $region22: #{tpu_custom_call.1} parent=0 // pred_check
    _
  $region23: #{tpu_custom_call.1} parent=0 // pred_check_branch
    %27 = sbr.rel (0) target = $region25
  $region24: #{tpu_custom_call.1} parent=0 // pred_region
    _
  $region25: #{tpu_custom_call.1} parent=0 // pred_fallthru
    _
  // Predicated region
  $region26: #{tpu_custom_call.1} parent=0 // pred_check
    _
  $region27: #{tpu_custom_call.1} parent=0 // pred_check_branch
    %29 = sbr.rel (0) target = $region29
  $region28: #{tpu_custom_call.1} parent=0 // pred_region
    _
  $region29: #{tpu_custom_call.1} parent=0 // pred_fallthru
    _
  // Predicated region
  $region30: #{tpu_custom_call.1} parent=0 // pred_check
    _
  $region31: #{tpu_custom_call.1} parent=0 // pred_check_branch
    %31 = sbr.rel (0) target = $region33
  $region32: #{tpu_custom_call.1} parent=0 // pred_region
    _
  $region33: #{tpu_custom_call.1} parent=0 // pred_fallthru
    _
  // Predicated region
  $region34: #{tpu_custom_call.1} parent=0 // pred_check
    _
  $region35: #{tpu_custom_call.1} parent=0 // pred_check_branch
    %33 = sbr.rel (0) target = $region37
  $region36: #{tpu_custom_call.1} parent=0 // pred_region
    _
  $region37: #{tpu_custom_call.1} parent=0 // pred_fallthru
    _
  %v35 = vld [vmem:[%s0] sm:$0xf]
  %v36 = vld [vmem:[%s0 + $0x4] sm:$0xf]
  %v37 = vld [vmem:[%s0 + $0x8] sm:$0xf]
  %v38 = vld [vmem:[%s0 + $0xc] sm:$0xf]
  %v39 = vld [vmem:[%s0 + $0x10] sm:$0xf]
  %v40 = vld [vmem:[%s0 + $0x14] sm:$0xf]
  %v41 = vld [vmem:[%s0 + $0x18] sm:$0xf]
  %v42 = vld [vmem:[%s0 + $0x1c] sm:$0xf]
  %v43 = vld [vmem:[%s0 + $0x20] sm:$0xf]
  %v44 = vld [vmem:[%s0 + $0x24] sm:$0xf]
  %v45 = vld [vmem:[%s0 + $0x28] sm:$0xf]
  %v46 = vld [vmem:[%s0 + $0x2c] sm:$0xf]
  %v47 = vld [vmem:[%s0 + $0x30] sm:$0xf]
  %v48 = vld [vmem:[%s0 + $0x34] sm:$0xf]
  %v49 = vld [vmem:[%s0 + $0x38] sm:$0xf]
  %v50 = vld [vmem:[%s0 + $0x3c] sm:$0xf]
  %v51 = vld [vmem:[%s1] sm:$0xf]
  %v52 = vld [vmem:[%s1 + $0x4] sm:$0xf]
  %v53 = vld [vmem:[%s1 + $0x8] sm:$0xf]
  %v54 = vld [vmem:[%s1 + $0xc] sm:$0xf]
  %v55 = vld [vmem:[%s2] sm:$0x1]
  %v57 = vlaneseq
  %v58 = vshrl.u32 %v57, 7
  %v59 = vsub.s32 0, %v58
  %v60 = vrot.slane %v55, %v59
  %v78 = vunpack.c.l.b16 %v35
  %v79 = vunpack.c.l.b16 %v36
  %v80 = vunpack.c.l.b16 %v37
  %v81 = vunpack.c.l.b16 %v38
  %v82 = vunpack.c.l.b16 %v39
  %v83 = vunpack.c.l.b16 %v40
  %v84 = vunpack.c.l.b16 %v41
  %v85 = vunpack.c.l.b16 %v42
  %v86 = vunpack.c.l.b16 %v43
  %v87 = vunpack.c.l.b16 %v44
  %v88 = vunpack.c.l.b16 %v45
  %v89 = vunpack.c.l.b16 %v46
  %v90 = vunpack.c.l.b16 %v47
  %v91 = vunpack.c.l.b16 %v48
  %v92 = vunpack.c.l.b16 %v49
  %v93 = vunpack.c.l.b16 %v50
  %v94 = vpack.c.b16 %v79, %v78
  %v95 = vpack.c.b16 %v81, %v80
  %v96 = vpack.c.b16 %v83, %v82
  %v97 = vpack.c.b16 %v85, %v84
  %v98 = vpack.c.b16 %v87, %v86
  %v99 = vpack.c.b16 %v89, %v88
  %v100 = vpack.c.b16 %v91, %v90
  %v101 = vpack.c.b16 %v93, %v92
  %v106 = vunpack.c.l.b16 %v51
  %v107 = vunpack.c.l.b16 %v52
  %v108 = vunpack.c.l.b16 %v53
  %v109 = vunpack.c.l.b16 %v54
  %v110 = vpack.c.b16 %v107, %v106
  %v111 = vpack.c.b16 %v109, %v108
  %vm114 = vcmask 261120
  %v116 = vsel %vm114, %v94, 0
  %v119 = vsel %vm114, %v95, 0
  %v122 = vsel %vm114, %v96, 0
  %v125 = vsel %vm114, %v97, 0
  %v128 = vsel %vm114, %v98, 0
  %v131 = vsel %vm114, %v99, 0
  %v134 = vsel %vm114, %v100, 0
  %v137 = vsel %vm114, %v101, 0
  %139 = vmatprep.subr.bf16.mxu0 0
  %140 = vmatpush1.bf16.msra.mxu0 %v110
  %141 = vmatprep.subr.bf16.mxu0 0
  %142 = vmatpush1.bf16.msra.mxu0 %v111
  %143 = vmatprep.subr.bf16.mxu0 0
  %144 = vmatpush1.bf16.msra.mxu0 0
  %145 = vmatprep.subr.bf16.mxu0 0
  %146 = vmatpush1.bf16.msra.mxu0 0
  %147 = vmatprep.subr.bf16.mxu0 0
  %148 = vmatpush1.bf16.msra.mxu0 0
  %149 = vmatprep.subr.bf16.mxu0 0
  %150 = vmatpush1.bf16.msra.mxu0 0
  %151 = vmatprep.subr.bf16.mxu0 0
  %152 = vmatpush1.bf16.msra.mxu0 0
  %153 = vmatprep.subr.bf16.mxu0 0
  %154 = vmatpush1.bf16.msra.mxu0 0
  %155 = vmatprep.subr.bf16.mxu0 0
  %156 = vmatpush1.bf16.msra.mxu0 0
  %157 = vmatprep.subr.bf16.mxu0 0
  %158 = vmatpush1.bf16.msra.mxu0 0
  %159 = vmatprep.subr.bf16.mxu0 0
  %160 = vmatpush1.bf16.msra.mxu0 0
  %161 = vmatprep.subr.bf16.mxu0 0
  %162 = vmatpush1.bf16.msra.mxu0 0
  %163 = vmatprep.subr.bf16.mxu0 0
  %164 = vmatpush1.bf16.msra.mxu0 0
  %165 = vmatprep.subr.bf16.mxu0 0
  %166 = vmatpush1.bf16.msra.mxu0 0
  %167 = vmatprep.subr.bf16.mxu0 0
  %168 = vmatpush1.bf16.msra.mxu0 0
  %169 = vmatprep.subr.bf16.mxu0 0
  %170 = vmatpush1.bf16.msra.mxu0 0
  %171 = vmatprep.mubr.bf16.mxu0 0
  %172 = vmatmul.mubr.bf16.gmra.mrb[0].mxu0 %v116
  %v173 = vpop.f32.mrb[0].mxu0
  %v174 = vadd.f32 %v60, %v173
  %v175 = vpop.f32.mrb[0].mxu0
  %v176 = vpop.f32.mrb[0].mxu0
  %v177 = vadd.f32 %v60, %v176
  %v178 = vpop.f32.mrb[0].mxu0
  %179 = vmatprep.mubr.bf16.mxu0 0
  %180 = vmatmul.mubr.bf16.gmra.mrb[0].mxu0 %v119
  %v181 = vpop.f32.mrb[0].mxu0
  %v182 = vadd.f32 %v60, %v181
  %v183 = vpop.f32.mrb[0].mxu0
  %v184 = vpop.f32.mrb[0].mxu0
  %v185 = vadd.f32 %v60, %v184
  %v186 = vpop.f32.mrb[0].mxu0
  %187 = vmatprep.mubr.bf16.mxu0 0
  %188 = vmatmul.mubr.bf16.gmra.mrb[0].mxu0 %v122
  %v189 = vpop.f32.mrb[0].mxu0
  %v190 = vadd.f32 %v60, %v189
  %v191 = vpop.f32.mrb[0].mxu0
  %v192 = vpop.f32.mrb[0].mxu0
  %v193 = vadd.f32 %v60, %v192
  %v194 = vpop.f32.mrb[0].mxu0
  %195 = vmatprep.mubr.bf16.mxu0 0
  %196 = vmatmul.mubr.bf16.gmra.mrb[0].mxu0 %v125
  %v197 = vpop.f32.mrb[0].mxu0
  %v198 = vadd.f32 %v60, %v197
  %v199 = vpop.f32.mrb[0].mxu0
  %v200 = vpop.f32.mrb[0].mxu0
  %v201 = vadd.f32 %v60, %v200
  %v202 = vpop.f32.mrb[0].mxu0
  %203 = vmatprep.mubr.bf16.mxu0 0
  %204 = vmatmul.mubr.bf16.gmra.mrb[0].mxu0 %v128
  %v205 = vpop.f32.mrb[0].mxu0
  %v206 = vadd.f32 %v60, %v205
  %v207 = vpop.f32.mrb[0].mxu0
  %v208 = vpop.f32.mrb[0].mxu0
  %v209 = vadd.f32 %v60, %v208
  %v210 = vpop.f32.mrb[0].mxu0
  %211 = vmatprep.mubr.bf16.mxu0 0
  %212 = vmatmul.mubr.bf16.gmra.mrb[0].mxu0 %v131
  %v213 = vpop.f32.mrb[0].mxu0
  %v214 = vadd.f32 %v60, %v213
  %v215 = vpop.f32.mrb[0].mxu0
  %v216 = vpop.f32.mrb[0].mxu0
  %v217 = vadd.f32 %v60, %v216
  %v218 = vpop.f32.mrb[0].mxu0
  %219 = vmatprep.mubr.bf16.mxu0 0
  %220 = vmatmul.mubr.bf16.gmra.mrb[0].mxu0 %v134
  %v221 = vpop.f32.mrb[0].mxu0
  %v222 = vadd.f32 %v60, %v221
  %v223 = vpop.f32.mrb[0].mxu0
  %v224 = vpop.f32.mrb[0].mxu0
  %v225 = vadd.f32 %v60, %v224
  %v226 = vpop.f32.mrb[0].mxu0
  %227 = vmatprep.mubr.bf16.mxu0 0
  %228 = vmatmul.mubr.bf16.gmra.mrb[0].mxu0 %v137
  %v229 = vpop.f32.mrb[0].mxu0
  %v230 = vadd.f32 %v60, %v229
  %v231 = vpop.f32.mrb[0].mxu0
  %v232 = vpop.f32.mrb[0].mxu0
  %v233 = vadd.f32 %v60, %v232
  %v234 = vpop.f32.mrb[0].mxu0
  %235 = vdwg.mxu0
  %v236 = vmax.f32 %v174, 0.0
  %v237 = vmax.f32 %v177, 0.0
  %v238 = vmax.f32 %v182, 0.0
  %v239 = vmax.f32 %v185, 0.0
  %v240 = vmax.f32 %v190, 0.0
  %v241 = vmax.f32 %v193, 0.0
  %v242 = vmax.f32 %v198, 0.0
  %v243 = vmax.f32 %v201, 0.0
  %v244 = vmax.f32 %v206, 0.0
  %v245 = vmax.f32 %v209, 0.0
  %v246 = vmax.f32 %v214, 0.0
  %v247 = vmax.f32 %v217, 0.0
  %v248 = vmax.f32 %v222, 0.0
  %v249 = vmax.f32 %v225, 0.0
  %v250 = vmax.f32 %v230, 0.0
  %v251 = vmax.f32 %v233, 0.0
  %v252 = vpack.c.bf16 %v237, %v236
  %v253 = vpack.c.bf16 %v239, %v238
  %v254 = vpack.c.bf16 %v241, %v240
  %v255 = vpack.c.bf16 %v243, %v242
  %v256 = vpack.c.bf16 %v245, %v244
  %v257 = vpack.c.bf16 %v247, %v246
  %v258 = vpack.c.bf16 %v249, %v248
  %v259 = vpack.c.bf16 %v251, %v250
  %v260 = vld [vmem:[%s3] sm:$0xf]
  %v261 = vld [vmem:[%s3 + $0x4] sm:$0xf]
  %v262 = vld [vmem:[%s3 + $0x8] sm:$0xf]
  %v263 = vld [vmem:[%s3 + $0xc] sm:$0xf]
  %v264 = vld [vmem:[%s3 + $0x10] sm:$0xf]
  %v265 = vld [vmem:[%s3 + $0x14] sm:$0xf]
  %v266 = vld [vmem:[%s3 + $0x18] sm:$0xf]
  %v267 = vld [vmem:[%s3 + $0x1c] sm:$0xf]
  %v268 = vld [vmem:[%s4] sm:$0x1]
  %v270 = vlaneseq
  %v271 = vshrl.u32 %v270, 7
  %v272 = vsub.s32 0, %v271
  %v273 = vrot.slane %v268, %v272
  %v283 = vunpack.c.l.b16 %v260
  %v284 = vunpack.c.l.b16 %v261
  %v285 = vunpack.c.l.b16 %v262
  %v286 = vunpack.c.l.b16 %v263
  %v287 = vunpack.c.l.b16 %v264
  %v288 = vunpack.c.l.b16 %v265
  %v289 = vunpack.c.l.b16 %v266
  %v290 = vunpack.c.l.b16 %v267
  %v291 = vpack.c.b16 %v284, %v283
  %v292 = vpack.c.b16 %v286, %v285
  %v293 = vpack.c.b16 %v288, %v287
  %v294 = vpack.c.b16 %v290, %v289
  %vm299 = vcmask 523264
  %v301 = vsel %vm299, %v252, 0
  %v304 = vsel %vm299, %v253, 0
  %v307 = vsel %vm299, %v254, 0
  %v310 = vsel %vm299, %v255, 0
  %v313 = vsel %vm299, %v256, 0
  %v316 = vsel %vm299, %v257, 0
  %v319 = vsel %vm299, %v258, 0
  %v322 = vsel %vm299, %v259, 0
  %324 = vmatprep.subr.bf16.mxu0 0
  %325 = vmatpush1.bf16.msra.mxu0 %v291
  %326 = vmatprep.subr.bf16.mxu0 0
  %327 = vmatpush1.bf16.msra.mxu0 %v292
  %328 = vmatprep.subr.bf16.mxu0 0
  %329 = vmatpush1.bf16.msra.mxu0 %v293
  %330 = vmatprep.subr.bf16.mxu0 0
  %331 = vmatpush1.bf16.msra.mxu0 %v294
  %332 = vmatprep.subr.bf16.mxu0 0
  %333 = vmatpush1.bf16.msra.mxu0 0
  %334 = vmatprep.subr.bf16.mxu0 0
  %335 = vmatpush1.bf16.msra.mxu0 0
  %336 = vmatprep.subr.bf16.mxu0 0
  %337 = vmatpush1.bf16.msra.mxu0 0
  %338 = vmatprep.subr.bf16.mxu0 0
  %339 = vmatpush1.bf16.msra.mxu0 0
  %340 = vmatprep.subr.bf16.mxu0 0
  %341 = vmatpush1.bf16.msra.mxu0 0
  %342 = vmatprep.subr.bf16.mxu0 0
  %343 = vmatpush1.bf16.msra.mxu0 0
  %344 = vmatprep.subr.bf16.mxu0 0
  %345 = vmatpush1.bf16.msra.mxu0 0
  %346 = vmatprep.subr.bf16.mxu0 0
  %347 = vmatpush1.bf16.msra.mxu0 0
  %348 = vmatprep.subr.bf16.mxu0 0
  %349 = vmatpush1.bf16.msra.mxu0 0
  %350 = vmatprep.subr.bf16.mxu0 0
  %351 = vmatpush1.bf16.msra.mxu0 0
  %352 = vmatprep.subr.bf16.mxu0 0
  %353 = vmatpush1.bf16.msra.mxu0 0
  %354 = vmatprep.subr.bf16.mxu0 0
  %355 = vmatpush1.bf16.msra.mxu0 0
  %356 = vmatprep.mubr.bf16.mxu0 0
  %357 = vmatmul.mubr.bf16.gmra.mrb[0].mxu0 %v301
  %v358 = vpop.f32.mrb[0].mxu0
  %v359 = vadd.f32 %v273, %v358
  %v360 = vpop.f32.mrb[0].mxu0
  %v361 = vpop.f32.mrb[0].mxu0
  %v362 = vadd.f32 %v273, %v361
  %v363 = vpop.f32.mrb[0].mxu0
  %364 = vmatprep.mubr.bf16.mxu0 0
  %365 = vmatmul.mubr.bf16.gmra.mrb[0].mxu0 %v304
  %v366 = vpop.f32.mrb[0].mxu0
  %v367 = vadd.f32 %v273, %v366
  %v368 = vpop.f32.mrb[0].mxu0
  %v369 = vpop.f32.mrb[0].mxu0
  %v370 = vadd.f32 %v273, %v369
  %v371 = vpop.f32.mrb[0].mxu0
  %372 = vmatprep.mubr.bf16.mxu0 0
  %373 = vmatmul.mubr.bf16.gmra.mrb[0].mxu0 %v307
  %v374 = vpop.f32.mrb[0].mxu0
  %v375 = vadd.f32 %v273, %v374
  %v376 = vpop.f32.mrb[0].mxu0
  %v377 = vpop.f32.mrb[0].mxu0
  %v378 = vadd.f32 %v273, %v377
  %v379 = vpop.f32.mrb[0].mxu0
  %380 = vmatprep.mubr.bf16.mxu0 0
  %381 = vmatmul.mubr.bf16.gmra.mrb[0].mxu0 %v310
  %v382 = vpop.f32.mrb[0].mxu0
  %v383 = vadd.f32 %v273, %v382
  %v384 = vpop.f32.mrb[0].mxu0
  %v385 = vpop.f32.mrb[0].mxu0
  %v386 = vadd.f32 %v273, %v385
  %v387 = vpop.f32.mrb[0].mxu0
  %388 = vmatprep.mubr.bf16.mxu0 0
  %389 = vmatmul.mubr.bf16.gmra.mrb[0].mxu0 %v313
  %v390 = vpop.f32.mrb[0].mxu0
  %v391 = vadd.f32 %v273, %v390
  %v392 = vpop.f32.mrb[0].mxu0
  %v393 = vpop.f32.mrb[0].mxu0
  %v394 = vadd.f32 %v273, %v393
  %v395 = vpop.f32.mrb[0].mxu0
  %396 = vmatprep.mubr.bf16.mxu0 0
  %397 = vmatmul.mubr.bf16.gmra.mrb[0].mxu0 %v316
  %v398 = vpop.f32.mrb[0].mxu0
  %v399 = vadd.f32 %v273, %v398
  %v400 = vpop.f32.mrb[0].mxu0
  %v401 = vpop.f32.mrb[0].mxu0
  %v402 = vadd.f32 %v273, %v401
  %v403 = vpop.f32.mrb[0].mxu0
  %404 = vmatprep.mubr.bf16.mxu0 0
  %405 = vmatmul.mubr.bf16.gmra.mrb[0].mxu0 %v319
  %v406 = vpop.f32.mrb[0].mxu0
  %v407 = vadd.f32 %v273, %v406
  %v408 = vpop.f32.mrb[0].mxu0
  %v409 = vpop.f32.mrb[0].mxu0
  %v410 = vadd.f32 %v273, %v409
  %v411 = vpop.f32.mrb[0].mxu0
  %412 = vmatprep.mubr.bf16.mxu0 0
  %413 = vmatmul.mubr.bf16.gmra.mrb[0].mxu0 %v322
  %v414 = vpop.f32.mrb[0].mxu0
  %v415 = vadd.f32 %v273, %v414
  %v416 = vpop.f32.mrb[0].mxu0
  %v417 = vpop.f32.mrb[0].mxu0
  %v418 = vadd.f32 %v273, %v417
  %v419 = vpop.f32.mrb[0].mxu0
  %420 = vdwg.mxu0
  %v421 = vmax.f32 %v359, 0.0
  %v422 = vmax.f32 %v362, 0.0
  %v423 = vmax.f32 %v367, 0.0
  %v424 = vmax.f32 %v370, 0.0
  %v425 = vmax.f32 %v375, 0.0
  %v426 = vmax.f32 %v378, 0.0
  %v427 = vmax.f32 %v383, 0.0
  %v428 = vmax.f32 %v386, 0.0
  %v429 = vmax.f32 %v391, 0.0
  %v430 = vmax.f32 %v394, 0.0
  %v431 = vmax.f32 %v399, 0.0
  %v432 = vmax.f32 %v402, 0.0
  %v433 = vmax.f32 %v407, 0.0
  %v434 = vmax.f32 %v410, 0.0
  %v435 = vmax.f32 %v415, 0.0
  %v436 = vmax.f32 %v418, 0.0
  %v437 = vpack.c.bf16 %v422, %v421
  %v438 = vpack.c.bf16 %v424, %v423
  %v439 = vpack.c.bf16 %v426, %v425
  %v440 = vpack.c.bf16 %v428, %v427
  %v441 = vpack.c.bf16 %v430, %v429
  %v442 = vpack.c.bf16 %v432, %v431
  %v443 = vpack.c.bf16 %v434, %v433
  %v444 = vpack.c.bf16 %v436, %v435
  %v445 = vld [vmem:[%s5] sm:$0xf]
  %v446 = vld [vmem:[%s5 + $0x4] sm:$0xf]
  %v447 = vld [vmem:[%s5 + $0x8] sm:$0xf]
  %v448 = vld [vmem:[%s5 + $0xc] sm:$0xf]
  %v449 = vld [vmem:[%s6] sm:$0x1]
  %v451 = vlaneseq
  %v452 = vshrl.u32 %v451, 7
  %v453 = vsub.s32 0, %v452
  %v454 = vrot.slane %v449, %v453
  %v460 = vunpack.c.l.b16 %v445
  %v461 = vunpack.c.l.b16 %v446
  %v462 = vunpack.c.l.b16 %v447
  %v463 = vunpack.c.l.b16 %v448
  %v464 = vpack.c.b16 %v461, %v460
  %v465 = vpack.c.b16 %v463, %v462
  %v469 = vsel %vm114, %v437, 0
  %v472 = vsel %vm114, %v438, 0
  %v475 = vsel %vm114, %v439, 0
  %v478 = vsel %vm114, %v440, 0
  %v481 = vsel %vm114, %v441, 0
  %v484 = vsel %vm114, %v442, 0
  %v487 = vsel %vm114, %v443, 0
  %v490 = vsel %vm114, %v444, 0
  %492 = vmatprep.subr.bf16.mxu0 0
  %493 = vmatpush1.bf16.msra.mxu0 %v464
  %494 = vmatprep.subr.bf16.mxu0 0
  %495 = vmatpush1.bf16.msra.mxu0 %v465
  %496 = vmatprep.subr.bf16.mxu0 0
  %497 = vmatpush1.bf16.msra.mxu0 0
  %498 = vmatprep.subr.bf16.mxu0 0
  %499 = vmatpush1.bf16.msra.mxu0 0
  %500 = vmatprep.subr.bf16.mxu0 0
  %501 = vmatpush1.bf16.msra.mxu0 0
  %502 = vmatprep.subr.bf16.mxu0 0
  %503 = vmatpush1.bf16.msra.mxu0 0
  %504 = vmatprep.subr.bf16.mxu0 0
  %505 = vmatpush1.bf16.msra.mxu0 0
  %506 = vmatprep.subr.bf16.mxu0 0
  %507 = vmatpush1.bf16.msra.mxu0 0
  %508 = vmatprep.subr.bf16.mxu0 0
  %509 = vmatpush1.bf16.msra.mxu0 0
  %510 = vmatprep.subr.bf16.mxu0 0
  %511 = vmatpush1.bf16.msra.mxu0 0
  %512 = vmatprep.subr.bf16.mxu0 0
  %513 = vmatpush1.bf16.msra.mxu0 0
  %514 = vmatprep.subr.bf16.mxu0 0
  %515 = vmatpush1.bf16.msra.mxu0 0
  %516 = vmatprep.subr.bf16.mxu0 0
  %517 = vmatpush1.bf16.msra.mxu0 0
  %518 = vmatprep.subr.bf16.mxu0 0
  %519 = vmatpush1.bf16.msra.mxu0 0
  %520 = vmatprep.subr.bf16.mxu0 0
  %521 = vmatpush1.bf16.msra.mxu0 0
  %522 = vmatprep.subr.bf16.mxu0 0
  %523 = vmatpush1.bf16.msra.mxu0 0
  %524 = vmatprep.mubr.bf16.mxu0 0
  %525 = vmatmul.mubr.bf16.gmra.mrb[0].mxu0 %v469
  %v526 = vpop.f32.mrb[0].mxu0
  %v527 = vadd.f32 %v454, %v526
  %v528 = vpop.f32.mrb[0].mxu0
  %v529 = vpop.f32.mrb[0].mxu0
  %v530 = vadd.f32 %v454, %v529
  %v531 = vpop.f32.mrb[0].mxu0
  %532 = vmatprep.mubr.bf16.mxu0 0
  %533 = vmatmul.mubr.bf16.gmra.mrb[0].mxu0 %v472
  %v534 = vpop.f32.mrb[0].mxu0
  %v535 = vadd.f32 %v454, %v534
  %v536 = vpop.f32.mrb[0].mxu0
  %v537 = vpop.f32.mrb[0].mxu0
  %v538 = vadd.f32 %v454, %v537
  %v539 = vpop.f32.mrb[0].mxu0
  %540 = vmatprep.mubr.bf16.mxu0 0
  %541 = vmatmul.mubr.bf16.gmra.mrb[0].mxu0 %v475
  %v542 = vpop.f32.mrb[0].mxu0
  %v543 = vadd.f32 %v454, %v542
  %v544 = vpop.f32.mrb[0].mxu0
  %v545 = vpop.f32.mrb[0].mxu0
  %v546 = vadd.f32 %v454, %v545
  %v547 = vpop.f32.mrb[0].mxu0
  %548 = vmatprep.mubr.bf16.mxu0 0
  %549 = vmatmul.mubr.bf16.gmra.mrb[0].mxu0 %v478
  %v550 = vpop.f32.mrb[0].mxu0
  %v551 = vadd.f32 %v454, %v550
  %v552 = vpop.f32.mrb[0].mxu0
  %v553 = vpop.f32.mrb[0].mxu0
  %v554 = vadd.f32 %v454, %v553
  %v555 = vpop.f32.mrb[0].mxu0
  %556 = vmatprep.mubr.bf16.mxu0 0
  %557 = vmatmul.mubr.bf16.gmra.mrb[0].mxu0 %v481
  %v558 = vpop.f32.mrb[0].mxu0
  %v559 = vadd.f32 %v454, %v558
  %v560 = vpop.f32.mrb[0].mxu0
  %v561 = vpop.f32.mrb[0].mxu0
  %v562 = vadd.f32 %v454, %v561
  %v563 = vpop.f32.mrb[0].mxu0
  %564 = vmatprep.mubr.bf16.mxu0 0
  %565 = vmatmul.mubr.bf16.gmra.mrb[0].mxu0 %v484
  %v566 = vpop.f32.mrb[0].mxu0
  %v567 = vadd.f32 %v454, %v566
  %v568 = vpop.f32.mrb[0].mxu0
  %v569 = vpop.f32.mrb[0].mxu0
  %v570 = vadd.f32 %v454, %v569
  %v571 = vpop.f32.mrb[0].mxu0
  %572 = vmatprep.mubr.bf16.mxu0 0
  %573 = vmatmul.mubr.bf16.gmra.mrb[0].mxu0 %v487
  %v574 = vpop.f32.mrb[0].mxu0
  %v575 = vadd.f32 %v454, %v574
  %v576 = vpop.f32.mrb[0].mxu0
  %v577 = vpop.f32.mrb[0].mxu0
  %v578 = vadd.f32 %v454, %v577
  %v579 = vpop.f32.mrb[0].mxu0
  %580 = vmatprep.mubr.bf16.mxu0 0
  %581 = vmatmul.mubr.bf16.gmra.mrb[0].mxu0 %v490
  %v582 = vpop.f32.mrb[0].mxu0
  %v583 = vadd.f32 %v454, %v582
  %v584 = vpop.f32.mrb[0].mxu0
  %v585 = vpop.f32.mrb[0].mxu0
  %v586 = vadd.f32 %v454, %v585
  %v587 = vpop.f32.mrb[0].mxu0
  %588 = vdwg.mxu0
  %v589 = vmax.f32 %v527, 0.0
  %v590 = vmax.f32 %v530, 0.0
  %v591 = vmax.f32 %v535, 0.0
  %v592 = vmax.f32 %v538, 0.0
  %v593 = vmax.f32 %v543, 0.0
  %v594 = vmax.f32 %v546, 0.0
  %v595 = vmax.f32 %v551, 0.0
  %v596 = vmax.f32 %v554, 0.0
  %v597 = vmax.f32 %v559, 0.0
  %v598 = vmax.f32 %v562, 0.0
  %v599 = vmax.f32 %v567, 0.0
  %v600 = vmax.f32 %v570, 0.0
  %v601 = vmax.f32 %v575, 0.0
  %v602 = vmax.f32 %v578, 0.0
  %v603 = vmax.f32 %v583, 0.0
  %v604 = vmax.f32 %v586, 0.0
  %v605 = vld [vmem:[%s7] sm:$0x1]
  %v607 = vlaneseq
  %v608 = vshrl.u32 %v607, 7
  %v609 = vsub.s32 0, %v608
  %v610 = vrot.slane %v605, %v609
  %v612 = vmul.f32 %v589, %v610
  %v613 = vmul.f32 %v590, %v610
  %v614 = vmul.f32 %v591, %v610
  %v615 = vmul.f32 %v592, %v610
  %v616 = vmul.f32 %v593, %v610
  %v617 = vmul.f32 %v594, %v610
  %v618 = vmul.f32 %v595, %v610
  %v619 = vmul.f32 %v596, %v610
  %v620 = vmul.f32 %v597, %v610
  %v621 = vmul.f32 %v598, %v610
  %v622 = vmul.f32 %v599, %v610
  %v623 = vmul.f32 %v600, %v610
  %v624 = vmul.f32 %v601, %v610
  %v625 = vmul.f32 %v602, %v610
  %v626 = vmul.f32 %v603, %v610
  %v627 = vmul.f32 %v604, %v610
  %vm628 = vcmask 130048
  %v629 = vsel %vm628, %v612, 0.0
  %630 = vadd.xlane.f32.xlu0 %v629
  %v631 = vpop.xlane.xlu0 %630
  %v632 = vsel %vm628, %v613, 0.0
  %633 = vadd.xlane.f32.xlu0 %v632
  %v634 = vpop.xlane.xlu0 %633
  %v635 = vsel %vm628, %v614, 0.0
  %636 = vadd.xlane.f32.xlu0 %v635
  %v637 = vpop.xlane.xlu0 %636
  %v638 = vsel %vm628, %v615, 0.0
  %639 = vadd.xlane.f32.xlu0 %v638
  %v640 = vpop.xlane.xlu0 %639
  %v641 = vsel %vm628, %v616, 0.0
  %642 = vadd.xlane.f32.xlu0 %v641
  %v643 = vpop.xlane.xlu0 %642
  %v644 = vsel %vm628, %v617, 0.0
  %645 = vadd.xlane.f32.xlu0 %v644
  %v646 = vpop.xlane.xlu0 %645
  %v647 = vsel %vm628, %v618, 0.0
  %648 = vadd.xlane.f32.xlu0 %v647
  %v649 = vpop.xlane.xlu0 %648
  %v650 = vsel %vm628, %v619, 0.0
  %651 = vadd.xlane.f32.xlu0 %v650
  %v652 = vpop.xlane.xlu0 %651
  %v653 = vsel %vm628, %v620, 0.0
  %654 = vadd.xlane.f32.xlu0 %v653
  %v655 = vpop.xlane.xlu0 %654
  %v656 = vsel %vm628, %v621, 0.0
  %657 = vadd.xlane.f32.xlu0 %v656
  %v658 = vpop.xlane.xlu0 %657
  %v659 = vsel %vm628, %v622, 0.0
  %660 = vadd.xlane.f32.xlu0 %v659
  %v661 = vpop.xlane.xlu0 %660
  %v662 = vsel %vm628, %v623, 0.0
  %663 = vadd.xlane.f32.xlu0 %v662
  %v664 = vpop.xlane.xlu0 %663
  %v665 = vsel %vm628, %v624, 0.0
  %666 = vadd.xlane.f32.xlu0 %v665
  %v667 = vpop.xlane.xlu0 %666
  %v668 = vsel %vm628, %v625, 0.0
  %669 = vadd.xlane.f32.xlu0 %v668
  %v670 = vpop.xlane.xlu0 %669
  %v671 = vsel %vm628, %v626, 0.0
  %672 = vadd.xlane.f32.xlu0 %v671
  %v673 = vpop.xlane.xlu0 %672
  %v674 = vsel %vm628, %v627, 0.0
  %675 = vadd.xlane.f32.xlu0 %v674
  %v676 = vpop.xlane.xlu0 %675
  %v677 = vld [vmem:[#allocation2] sm:$0x1]
  %v679 = vlaneseq
  %v680 = vshrl.u32 %v679, 7
  %v681 = vsub.s32 0, %v680
  %v682 = vrot.slane %v677, %v681
  %v684 = vadd.f32 %v631, %v682
  %v685 = vadd.f32 %v634, %v682
  %v686 = vadd.f32 %v637, %v682
  %v687 = vadd.f32 %v640, %v682
  %v688 = vadd.f32 %v643, %v682
  %v689 = vadd.f32 %v646, %v682
  %v690 = vadd.f32 %v649, %v682
  %v691 = vadd.f32 %v652, %v682
  %v692 = vadd.f32 %v655, %v682
  %v693 = vadd.f32 %v658, %v682
  %v694 = vadd.f32 %v661, %v682
  %v695 = vadd.f32 %v664, %v682
  %v696 = vadd.f32 %v667, %v682
  %v697 = vadd.f32 %v670, %v682
  %v698 = vadd.f32 %v673, %v682
  %v699 = vadd.f32 %v676, %v682
  %vm700 = vcmask 7168
  %701 = vst.msk [vmem:[%s9] sm:$0xff] %vm700, %v684
  %702 = vst.msk [vmem:[%s9 + $0x8] sm:$0xff] %vm700, %v685
  %703 = vst.msk [vmem:[%s9 + $0x10] sm:$0xff] %vm700, %v686
  %704 = vst.msk [vmem:[%s9 + $0x18] sm:$0xff] %vm700, %v687
  %705 = vst.msk [vmem:[%s9 + $0x20] sm:$0xff] %vm700, %v688
  %706 = vst.msk [vmem:[%s9 + $0x28] sm:$0xff] %vm700, %v689
  %707 = vst.msk [vmem:[%s9 + $0x30] sm:$0xff] %vm700, %v690
  %708 = vst.msk [vmem:[%s9 + $0x38] sm:$0xff] %vm700, %v691
  %709 = vst.msk [vmem:[%s9 + $0x40] sm:$0xff] %vm700, %v692
  %710 = vst.msk [vmem:[%s9 + $0x48] sm:$0xff] %vm700, %v693
  %711 = vst.msk [vmem:[%s9 + $0x50] sm:$0xff] %vm700, %v694
  %712 = vst.msk [vmem:[%s9 + $0x58] sm:$0xff] %vm700, %v695
  %713 = vst.msk [vmem:[%s9 + $0x60] sm:$0xff] %vm700, %v696
  %714 = vst.msk [vmem:[%s9 + $0x68] sm:$0xff] %vm700, %v697
  %715 = vst.msk [vmem:[%s9 + $0x70] sm:$0xff] %vm700, %v698
  %716 = vst.msk [vmem:[%s9 + $0x78] sm:$0xff] %vm700, %v699
  // Predicated region
  $region38: #{tpu_custom_call.1} parent=0 // pred_check
    _
  $region39: #{tpu_custom_call.1} parent=0 // pred_check_branch
    %718 = sbr.rel (0) target = $region41
  $region40: #{tpu_custom_call.1} parent=0 // pred_region
    _
  $region41: #{tpu_custom_call.1} parent=0 // pred_fallthru
    _
  // Predicated region
  $region42: #{tpu_custom_call.1} parent=0 // pred_check
    _
  $region43: #{tpu_custom_call.1} parent=0 // pred_check_branch
    %720 = sbr.rel (0) target = $region45
  $region44: #{tpu_custom_call.1} parent=0 // pred_region
    _
  $region45: #{tpu_custom_call.1} parent=0 // pred_fallthru
    _

</llo_original>
